<compile_context>
chip_gen: v7x
topology: tpu7x:2x2x1
jax: 0.10.0
libtpu: 0.0.40
codegen_flags: <defaults>
</compile_context>

<pallas_src>
import numpy as np
import jax
import jax.numpy as jnp
from jax.experimental import pallas as pl
from jax.experimental.pallas import tpu as pltpu


def _round_up(x, m):
    return (x + m - 1) // m * m


def _timestep_mlp_kernel(ts_ref, pe_ref, w1_ref, b1_ref, w2_ref, b2_ref, o_ref):
    """ts_ref: int32 [TB, 1]; pe_ref: bf16 [L, D]; w*: bf16 [D, D] (in, out);
    b*: f32 [1, D]; o_ref: f32 [TB, D].  (L, D are the padded sizes.)"""
    tb = o_ref.shape[0]
    L = pe_ref.shape[0]

    # --- vectorized gather: one-hot [TB, L] (exact bf16 0/1) x pe [L, D] -----
    ids = ts_ref[...]                                               # [TB, 1] int32
    cols = jax.lax.broadcasted_iota(jnp.int32, (tb, L), 1)          # [TB, L]
    one_hot = (cols == ids).astype(jnp.bfloat16)
    x = jnp.dot(one_hot, pe_ref[...],
                preferred_element_type=jnp.float32)                 # [TB, D] f32 (exact select)

    # --- SiLU MLP: bf16 operands into the MXU, f32 accumulate / elementwise --
    h = jnp.dot(x.astype(jnp.bfloat16), w1_ref[...],
                preferred_element_type=jnp.float32)                 # [TB, D]
    h = h + b1_ref[...]                                             # (1, D) broadcasts
    h = h * jax.nn.sigmoid(h)                                       # SiLU in f32 (EUP)
    y = jnp.dot(h.astype(jnp.bfloat16), w2_ref[...],
                preferred_element_type=jnp.float32)                 # [TB, D]
    y = y + b2_ref[...]
    o_ref[...] = y.astype(o_ref.dtype)


def timestep_embedder_forward(timesteps, pe, w1, b1, w2, b2, *, block_b=512):
    """timesteps: int [B]; pe: [max_len, D]; w*: [D, D] (in, out); b*: [D].

    Returns f32 [1, B, D]  (== torch time_embed(pe[timesteps]).permute(1, 0, 2))."""
    B = timesteps.shape[0]
    max_len, D = pe.shape

    # Lane-dense padding (multiples of 128) for features and pe rows.
    D_pad = _round_up(max(D, 128), 128)
    L_pad = _round_up(max(max_len, 128), 128)

    # One-time casts / pads outside the hot path (zero pads are exact no-ops).
    pe_bf = jnp.zeros((L_pad, D_pad), jnp.bfloat16)
    pe_bf = pe_bf.at[:max_len, :D].set(pe.astype(jnp.bfloat16))
    w1_bf = jnp.zeros((D_pad, D_pad), jnp.bfloat16).at[:D, :D].set(w1.astype(jnp.bfloat16))
    w2_bf = jnp.zeros((D_pad, D_pad), jnp.bfloat16).at[:D, :D].set(w2.astype(jnp.bfloat16))
    b1_p = jnp.zeros((1, D_pad), jnp.float32).at[0, :D].set(b1.astype(jnp.float32))
    b2_p = jnp.zeros((1, D_pad), jnp.float32).at[0, :D].set(b2.astype(jnp.float32))

    # Batch tiling: TB multiple of 16 (bf16 sublane packing).  Cap TB at half
    # the padded batch when B is large so grid_b >= 2 (v7x has 2 TensorCores).
    sub = 16
    tb = min(block_b, _round_up(B, sub))
    if B >= 2 * sub:
        tb = min(tb, _round_up((B + 1) // 2, sub))
    b_pad = _round_up(B, tb)
    grid_b = b_pad // tb

    # Clamp (OOB timestep safety) and pad the index vector.
    ts = jnp.clip(timesteps.astype(jnp.int32), 0, max_len - 1)
    ts = jnp.pad(ts, (0, b_pad - B)).reshape(b_pad, 1)

    # Explicit VMEM budget: resident bf16 pe/weights (single-buffered) +
    # double-buffered ts/out tiles, with 2x headroom, capped at v7x physical.
    vmem_needed = (L_pad * D_pad * 2                  # pe
                   + 2 * D_pad * D_pad * 2            # W1, W2
                   + 2 * D_pad * 4                    # b1, b2
                   + 2 * tb * 4                       # ts tile (double-buffered)
                   + 2 * tb * D_pad * 4)              # out tile (double-buffered)
    vmem_limit = int(min(max(2 * vmem_needed, 32 * 1024 * 1024), 64 * 1024 * 1024))

    cost = pl.CostEstimate(
        flops=2 * b_pad * L_pad * D_pad + 4 * b_pad * D_pad * D_pad,
        transcendentals=b_pad * D_pad,
        bytes_accessed=(L_pad * D_pad * 2 + 2 * D_pad * D_pad * 2
                        + 2 * D_pad * 4 + b_pad * 4 + b_pad * D_pad * 4),
    )

    out = pl.pallas_call(
        _timestep_mlp_kernel,
        out_shape=jax.ShapeDtypeStruct((b_pad, D_pad), jnp.float32),
        grid_spec=pltpu.PrefetchScalarGridSpec(
            num_scalar_prefetch=0,
            grid=(grid_b,),
            in_specs=[
                pl.BlockSpec((tb, 1), lambda i: (i, 0)),             # timesteps tile
                pl.BlockSpec((L_pad, D_pad), lambda i: (0, 0),
                             pipeline_mode=pl.Buffered(1)),          # pe, resident
                pl.BlockSpec((D_pad, D_pad), lambda i: (0, 0),
                             pipeline_mode=pl.Buffered(1)),          # W1 (in, out)
                pl.BlockSpec((1, D_pad), lambda i: (0, 0),
                             pipeline_mode=pl.Buffered(1)),          # b1
                pl.BlockSpec((D_pad, D_pad), lambda i: (0, 0),
                             pipeline_mode=pl.Buffered(1)),          # W2 (in, out)
                pl.BlockSpec((1, D_pad), lambda i: (0, 0),
                             pipeline_mode=pl.Buffered(1)),          # b2
            ],
            out_specs=pl.BlockSpec((tb, D_pad), lambda i: (i, 0)),
        ),
        compiler_params=pltpu.CompilerParams(
            dimension_semantics=("parallel",),        # B tiles independent (megacore)
            vmem_limit_bytes=vmem_limit),
        cost_estimate=cost,
    )(ts, pe_bf, w1_bf, b1_p, w2_bf, b2_p)

    out = out[:B, :D]
    return out[None, :, :]                            # [1, B, D]


def make_sinusoidal_pe(max_len, d_model):
    """Matches MDM's PositionalEncoding buffer (squeezed to [max_len, d_model])."""
    position = np.arange(max_len, dtype=np.float32)[:, None]
    div_term = np.exp(np.arange(0, d_model, 2, dtype=np.float32)
                      * (-np.log(10000.0) / d_model))
    pe = np.zeros((max_len, d_model), dtype=np.float32)
    pe[:, 0::2] = np.sin(position * div_term)
    pe[:, 1::2] = np.cos(position * div_term)
    return jnp.asarray(pe)


def init_linear(key, fan_in, fan_out):
    """PyTorch nn.Linear default init; returns W already transposed to (in, out)."""
    kw, kb = jax.random.split(key)
    bound = 1.0 / np.sqrt(fan_in)
    w = jax.random.uniform(kw, (fan_in, fan_out), jnp.float32, -bound, bound)
    b = jax.random.uniform(kb, (fan_out,), jnp.float32, -bound, bound)
    return w, b


if __name__ == "__main__":
    latent_dim = 32
    max_len = 64
    batch = 8

    key = jax.random.PRNGKey(0)
    k1, k2, k3 = jax.random.split(key, 3)

    pe = make_sinusoidal_pe(max_len, latent_dim)                 # [max_len, D]
    w1, b1 = init_linear(k1, latent_dim, latent_dim)
    w2, b2 = init_linear(k2, latent_dim, latent_dim)
    timesteps = jax.random.randint(k3, (batch,), 0, max_len, dtype=jnp.int32)

    out = timestep_embedder_forward(timesteps, pe, w1, b1, w2, b2)
    out = jax.block_until_ready(out)
    assert out.shape == (1, batch, latent_dim), out.shape

    # Pure-JAX f32 reference (kernel uses bf16 pe/weights on the MXU -> loose tol).
    x_ref = pe[timesteps]
    h_ref = x_ref @ w1 + b1
    h_ref = h_ref * jax.nn.sigmoid(h_ref)
    y_ref = (h_ref @ w2 + b2)[None, :, :]
    np.testing.assert_allclose(np.asarray(out), np.asarray(y_ref),
                               rtol=3e-2, atol=3e-2)

    print("KERNEL_OK")
</pallas_src>

<mosaic_0001>
module attributes {stable_mosaic.version = 11 : i64} {
  func.func @_timestep_mlp_kernel(%arg0: i32, %arg1: memref<16x1xi32, #tpu.memory_space<vmem>>, %arg2: memref<128x128xbf16, #tpu.memory_space<vmem>>, %arg3: memref<128x128xbf16, #tpu.memory_space<vmem>>, %arg4: memref<1x128xf32, #tpu.memory_space<vmem>>, %arg5: memref<128x128xbf16, #tpu.memory_space<vmem>>, %arg6: memref<1x128xf32, #tpu.memory_space<vmem>>, %arg7: memref<16x128xf32, #tpu.memory_space<vmem>>) attributes {dimension_semantics = [#tpu.dimension_semantics<parallel>], iteration_bounds = array<i64: 1>, scalar_prefetch = 0 : i64, scratch_operands = 0 : i64, tpu.core_type = #tpu.core_type<tc>, window_params = [{transform_indices = @transform_0, window_bounds = array<i64: 16, 1>}, {pipeline_mode = #tpu.pipeline_mode<synchronous>, transform_indices = @transform_1, window_bounds = array<i64: 128, 128>}, {pipeline_mode = #tpu.pipeline_mode<synchronous>, transform_indices = @transform_2, window_bounds = array<i64: 128, 128>}, {pipeline_mode = #tpu.pipeline_mode<synchronous>, transform_indices = @transform_3, window_bounds = array<i64: 1, 128>}, {pipeline_mode = #tpu.pipeline_mode<synchronous>, transform_indices = @transform_4, window_bounds = array<i64: 128, 128>}, {pipeline_mode = #tpu.pipeline_mode<synchronous>, transform_indices = @transform_5, window_bounds = array<i64: 1, 128>}, {transform_indices = @transform_6, window_bounds = array<i64: 16, 128>}]} {
    %c0 = arith.constant 0 : index
    %c0_0 = arith.constant 0 : index
    %0 = vector.load %arg1[%c0, %c0_0] : memref<16x1xi32, #tpu.memory_space<vmem>>, vector<16x1xi32>
    %1 = tpu.iota {dimensions = array<i32: 1>} : vector<16x128xi32>
    %2 = vector.broadcast %0 : vector<16x1xi32> to vector<16x128xi32>
    %3 = arith.cmpi eq, %1, %2 : vector<16x128xi32>
    %4 = arith.extui %3 : vector<16x128xi1> to vector<16x128xi32>
    %5 = arith.sitofp %4 : vector<16x128xi32> to vector<16x128xf32>
    %6 = arith.truncf %5 : vector<16x128xf32> to vector<16x128xbf16>
    %c0_1 = arith.constant 0 : index
    %c0_2 = arith.constant 0 : index
    %7 = vector.load %arg2[%c0_1, %c0_2] : memref<128x128xbf16, #tpu.memory_space<vmem>>, vector<128x128xbf16>
    %cst = arith.constant dense<0.000000e+00> : vector<16x128xf32>
    %8 = tpu.matmul %6, %7, %cst {dimension_numbers = #tpu.dot_dimension_numbers<[1], [0], [0], [1], [0, 0, 1, 1], [], []>} : vector<16x128xbf16>, vector<128x128xbf16>, vector<16x128xf32> -> vector<16x128xf32>
    %9 = arith.truncf %8 : vector<16x128xf32> to vector<16x128xbf16>
    %c0_3 = arith.constant 0 : index
    %c0_4 = arith.constant 0 : index
    %10 = vector.load %arg3[%c0_3, %c0_4] : memref<128x128xbf16, #tpu.memory_space<vmem>>, vector<128x128xbf16>
    %cst_5 = arith.constant dense<0.000000e+00> : vector<16x128xf32>
    %11 = tpu.matmul %9, %10, %cst_5 {dimension_numbers = #tpu.dot_dimension_numbers<[1], [0], [0], [1], [0, 0, 1, 1], [], []>} : vector<16x128xbf16>, vector<128x128xbf16>, vector<16x128xf32> -> vector<16x128xf32>
    %c0_6 = arith.constant 0 : index
    %c0_7 = arith.constant 0 : index
    %12 = vector.load %arg4[%c0_6, %c0_7] : memref<1x128xf32, #tpu.memory_space<vmem>>, vector<1x128xf32>
    %13 = vector.broadcast %12 : vector<1x128xf32> to vector<16x128xf32>
    %14 = arith.addf %11, %13 : vector<16x128xf32>
    %15 = arith.negf %14 : vector<16x128xf32>
    %16 = math.exp %15 : vector<16x128xf32>
    %cst_8 = arith.constant 1.000000e+00 : f32
    %17 = vector.broadcast %cst_8 : f32 to vector<16x128xf32>
    %18 = arith.addf %17, %16 : vector<16x128xf32>
    %19 = arith.divf %17, %18 : vector<16x128xf32>
    %20 = arith.mulf %14, %19 : vector<16x128xf32>
    %21 = arith.truncf %20 : vector<16x128xf32> to vector<16x128xbf16>
    %c0_9 = arith.constant 0 : index
    %c0_10 = arith.constant 0 : index
    %22 = vector.load %arg5[%c0_9, %c0_10] : memref<128x128xbf16, #tpu.memory_space<vmem>>, vector<128x128xbf16>
    %cst_11 = arith.constant dense<0.000000e+00> : vector<16x128xf32>
    %23 = tpu.matmul %21, %22, %cst_11 {dimension_numbers = #tpu.dot_dimension_numbers<[1], [0], [0], [1], [0, 0, 1, 1], [], []>} : vector<16x128xbf16>, vector<128x128xbf16>, vector<16x128xf32> -> vector<16x128xf32>
    %c0_12 = arith.constant 0 : index
    %c0_13 = arith.constant 0 : index
    %24 = vector.load %arg6[%c0_12, %c0_13] : memref<1x128xf32, #tpu.memory_space<vmem>>, vector<1x128xf32>
    %25 = vector.broadcast %24 : vector<1x128xf32> to vector<16x128xf32>
    %26 = arith.addf %23, %25 : vector<16x128xf32>
    %c0_14 = arith.constant 0 : index
    %c0_15 = arith.constant 0 : index
    %27 = vector.load %arg7[%c0_14, %c0_15] : memref<16x128xf32, #tpu.memory_space<vmem>>, vector<16x128xf32>
    tpu.vector_store %arg7[%c0_14, %c0_15], %26 {strides = array<i32>} : memref<16x128xf32, #tpu.memory_space<vmem>>, vector<16x128xf32>,
    return
  }
  func.func @transform_0(%arg0: i32) -> (i32, i32) {
    %c0_i32 = arith.constant 0 : i32
    %c0_i32_0 = arith.constant 0 : i32
    return %arg0, %c0_i32 : i32, i32
  }
  func.func @transform_1(%arg0: i32) -> (i32, i32) {
    %c0_i32 = arith.constant 0 : i32
    %c0_i32_0 = arith.constant 0 : i32
    %c0_i32_1 = arith.constant 0 : i32
    return %c0_i32, %c0_i32_0 : i32, i32
  }
  func.func @transform_2(%arg0: i32) -> (i32, i32) {
    %c0_i32 = arith.constant 0 : i32
    %c0_i32_0 = arith.constant 0 : i32
    %c0_i32_1 = arith.constant 0 : i32
    return %c0_i32, %c0_i32_0 : i32, i32
  }
  func.func @transform_3(%arg0: i32) -> (i32, i32) {
    %c0_i32 = arith.constant 0 : i32
    %c0_i32_0 = arith.constant 0 : i32
    %c0_i32_1 = arith.constant 0 : i32
    return %c0_i32, %c0_i32_0 : i32, i32
  }
  func.func @transform_4(%arg0: i32) -> (i32, i32) {
    %c0_i32 = arith.constant 0 : i32
    %c0_i32_0 = arith.constant 0 : i32
    %c0_i32_1 = arith.constant 0 : i32
    return %c0_i32, %c0_i32_0 : i32, i32
  }
  func.func @transform_5(%arg0: i32) -> (i32, i32) {
    %c0_i32 = arith.constant 0 : i32
    %c0_i32_0 = arith.constant 0 : i32
    %c0_i32_1 = arith.constant 0 : i32
    return %c0_i32, %c0_i32_0 : i32, i32
  }
  func.func @transform_6(%arg0: i32) -> (i32, i32) {
    %c0_i32 = arith.constant 0 : i32
    %c0_i32_0 = arith.constant 0 : i32
    return %arg0, %c0_i32 : i32, i32
  }
}

</mosaic_0001>

<llo_original>
// kernel: tpu_custom_call.1
$region0: #{tpu_custom_call.1}
  #allocation0 [shape = 'u32[]', space=smem, size = 0x4, offset = 0x4, fixed_abs, tag = 'smem constant byte address 0x4 - core index']
  #allocation1 [shape = 'u32[144,128]{1,0:T(1,128)}', space=vmem, size = 0x12000, scoped, tag = 'internal scratch']
  %s0 = inlined_call_operand.vmem [shape: s32[16,1], index: 0, kind: input, shape index: {}]
  %s1 = inlined_call_operand.hbm [shape: bf16[128,128], index: 1, kind: input, shape index: {}]
  %s2 = inlined_call_operand.hbm [shape: bf16[128,128], index: 2, kind: input, shape index: {}]
  %s3 = inlined_call_operand.vmem [shape: f32[1,128], index: 3, kind: input, shape index: {}]
  %s4 = inlined_call_operand.hbm [shape: bf16[128,128], index: 4, kind: input, shape index: {}]
  %s5 = inlined_call_operand.vmem [shape: f32[1,128], index: 5, kind: input, shape index: {}]
  %s6 = inlined_call_operand.hbm [shape: f32[16,128], index: 6, kind: output, shape index: {}]
  %s7 = sld [smem:[#allocation0]]
  $region46: #{tpu_custom_call.1} parent=0
    _
  %s9 = ssub.s32 1, %s7
  %s10 = scalar_select 0, %s9, %s7
  $region1: #{tpu_custom_call.1} parent=0
    #allocation2 [shape = 'u8[32768]{0}', space=vmem, size = 0x8000, scoped, tag = 'input window, operand 1, single buffered']
    #allocation3 [shape = 's32[1]{0}', space=sflag, size = 0x4, scoped, tag = 'scoped memory for tpu_custom_call.1']
    #allocation4 [shape = 's32[1]{0}', space=sflag, size = 0x4, scoped, tag = 'scoped memory for tpu_custom_call.1']
    #allocation5 [shape = 'u8[32768]{0}', space=vmem, size = 0x8000, scoped, tag = 'input window, operand 2, single buffered']
    #allocation6 [shape = 's32[1]{0}', space=sflag, size = 0x4, scoped, tag = 'scoped memory for tpu_custom_call.1']
    #allocation7 [shape = 'u8[32768]{0}', space=vmem, size = 0x8000, scoped, tag = 'input window, operand 4, single buffered']
    #allocation8 [shape = 'u8[8192]{0}', space=vmem, size = 0x2000, scoped, tag = 'output window, operand 0, single buffered']
    %11 = vsyncpa [#allocation3], 0
    %12 = vsyncpa [#allocation6], 0
    %13 = vsyncpa [#allocation4], 0
    // Predicated region
    $region2: #{tpu_custom_call.1} parent=1 // pred_check
      _
    $region3: #{tpu_custom_call.1} parent=1 // pred_check_branch
      %15 = sbr.rel (0) target = $region5
    $region4: #{tpu_custom_call.1} parent=1 // pred_region
      _
    $region5: #{tpu_custom_call.1} parent=1 // pred_fallthru
      _
    // Predicated region
    $region6: #{tpu_custom_call.1} parent=1 // pred_check
      _
    $region7: #{tpu_custom_call.1} parent=1 // pred_check_branch
      %17 = sbr.rel (0) target = $region9
    $region8: #{tpu_custom_call.1} parent=1 // pred_region
      %s19 = ssub.s32 1024, 1024
      %20 = vsyncadd [#allocation3], %s19
      %s21 = sshll.u32 [#allocation2], 4
      %s22 = int_to_ptr.vmem [resolvable:$true] %s21
      %27 = dma.hbm_to_vmem [thread:$0]  %s1, 1024, %s22, [#allocation3], 64, 64, 4
    $region9: #{tpu_custom_call.1} parent=1 // pred_fallthru
      _
    // Predicated region
    $region10: #{tpu_custom_call.1} parent=1 // pred_check
      _
    $region11: #{tpu_custom_call.1} parent=1 // pred_check_branch
      %29 = sbr.rel (0) target = $region13
    $region12: #{tpu_custom_call.1} parent=1 // pred_region
      %s31 = ssub.s32 1024, 1024
      %32 = vsyncadd [#allocation6], %s31
      %s33 = sshll.u32 [#allocation5], 4
      %s34 = int_to_ptr.vmem [resolvable:$true] %s33
      %39 = dma.hbm_to_vmem [thread:$0]  %s2, 1024, %s34, [#allocation6], 64, 64, 4
    $region13: #{tpu_custom_call.1} parent=1 // pred_fallthru
      _
    // Predicated region
    $region14: #{tpu_custom_call.1} parent=1 // pred_check
      _
    $region15: #{tpu_custom_call.1} parent=1 // pred_check_branch
      %41 = sbr.rel (0) target = $region17
    $region16: #{tpu_custom_call.1} parent=1 // pred_region
      _
    $region17: #{tpu_custom_call.1} parent=1 // pred_fallthru
      _
    // Predicated region
    $region18: #{tpu_custom_call.1} parent=1 // pred_check
      _
    $region19: #{tpu_custom_call.1} parent=1 // pred_check_branch
      %43 = sbr.rel (0) target = $region21
    $region20: #{tpu_custom_call.1} parent=1 // pred_region
      %s45 = ssub.s32 1024, 1024
      %46 = vsyncadd [#allocation6], %s45
      %s47 = sshll.u32 [#allocation7], 4
      %s48 = int_to_ptr.vmem [resolvable:$true] %s47
      %53 = dma.hbm_to_vmem [thread:$0]  %s4, 1024, %s48, [#allocation6], 64, 64, 4
    $region21: #{tpu_custom_call.1} parent=1 // pred_fallthru
      _
    // Predicated region
    $region22: #{tpu_custom_call.1} parent=1 // pred_check
      _
    $region23: #{tpu_custom_call.1} parent=1 // pred_check_branch
      %55 = sbr.rel (0) target = $region25
    $region24: #{tpu_custom_call.1} parent=1 // pred_region
      _
    $region25: #{tpu_custom_call.1} parent=1 // pred_fallthru
      _
    // Predicated region
    $region26: #{tpu_custom_call.1} parent=1 // pred_check
      _
    $region27: #{tpu_custom_call.1} parent=1 // pred_check_branch
      %57 = sbr.rel (0) target = $region29
    $region28: #{tpu_custom_call.1} parent=1 // pred_region
      %58 = dma.done [#allocation3], 1024
    $region29: #{tpu_custom_call.1} parent=1 // pred_fallthru
      _
    // Predicated region
    $region30: #{tpu_custom_call.1} parent=1 // pred_check
      _
    $region31: #{tpu_custom_call.1} parent=1 // pred_check_branch
      %60 = sbr.rel (0) target = $region33
    $region32: #{tpu_custom_call.1} parent=1 // pred_region
      %61 = dma.done [#allocation6], 1024
    $region33: #{tpu_custom_call.1} parent=1 // pred_fallthru
      _
    // Predicated region
    $region34: #{tpu_custom_call.1} parent=1 // pred_check
      _
    $region35: #{tpu_custom_call.1} parent=1 // pred_check_branch
      %63 = sbr.rel (0) target = $region37
    $region36: #{tpu_custom_call.1} parent=1 // pred_region
      %64 = dma.done [#allocation6], 1024
    $region37: #{tpu_custom_call.1} parent=1 // pred_fallthru
      _
    %v66 = vld [vmem:[%s0] sm:$0xff]
    %v67 = vld [vmem:[%s0 + $0x8] sm:$0xff]
    %v68 = vlaneseq
    %v69 = vand.u32 %v68, 127
    %70 = vset.pattern.permute.xlu0 0
    %71 = vperm.xlu0 %70, %v66
    %v72 = vpop.permute.xlu0 %71
    %73 = vset.pattern.permute.xlu0 0
    %74 = vperm.xlu0 %73, %v67
    %v75 = vpop.permute.xlu0 %74
    %vm76 = vcmp.eq.s32.totalorder %v69, %v72
    %vm77 = vcmp.eq.s32.totalorder %v69, %v75
    %v78 = vsel %vm76, 1, 0
    %v79 = vsel %vm77, 1, 0
    %v80 = vcvt.s32.f32 %v78
    %v81 = vcvt.s32.f32 %v79
    %v82 = vpack.c.bf16 %v81, %v80
    %v83 = vld [vmem:[#allocation2] sm:$0xf]
    %v84 = vld [vmem:[#allocation2 + $0x4] sm:$0xf]
    %v85 = vld [vmem:[#allocation2 + $0x8] sm:$0xf]
    %v86 = vld [vmem:[#allocation2 + $0xc] sm:$0xf]
    %v87 = vld [vmem:[#allocation2 + $0x10] sm:$0xf]
    %v88 = vld [vmem:[#allocation2 + $0x14] sm:$0xf]
    %v89 = vld [vmem:[#allocation2 + $0x18] sm:$0xf]
    %v90 = vld [vmem:[#allocation2 + $0x1c] sm:$0xf]
    %v91 = vld [vmem:[#allocation2 + $0x20] sm:$0xf]
    %v92 = vld [vmem:[#allocation2 + $0x24] sm:$0xf]
    %v93 = vld [vmem:[#allocation2 + $0x28] sm:$0xf]
    %v94 = vld [vmem:[#allocation2 + $0x2c] sm:$0xf]
    %v95 = vld [vmem:[#allocation2 + $0x30] sm:$0xf]
    %v96 = vld [vmem:[#allocation2 + $0x34] sm:$0xf]
    %v97 = vld [vmem:[#allocation2 + $0x38] sm:$0xf]
    %v98 = vld [vmem:[#allocation2 + $0x3c] sm:$0xf]
    %v115 = vunpack.c.l.b16 %v83
    %v116 = vunpack.c.l.b16 %v84
    %v117 = vunpack.c.l.b16 %v85
    %v118 = vunpack.c.l.b16 %v86
    %v119 = vunpack.c.l.b16 %v87
    %v120 = vunpack.c.l.b16 %v88
    %v121 = vunpack.c.l.b16 %v89
    %v122 = vunpack.c.l.b16 %v90
    %v123 = vunpack.c.l.b16 %v91
    %v124 = vunpack.c.l.b16 %v92
    %v125 = vunpack.c.l.b16 %v93
    %v126 = vunpack.c.l.b16 %v94
    %v127 = vunpack.c.l.b16 %v95
    %v128 = vunpack.c.l.b16 %v96
    %v129 = vunpack.c.l.b16 %v97
    %v130 = vunpack.c.l.b16 %v98
    %v131 = vpack.c.b16 %v116, %v115
    %v132 = vpack.c.b16 %v118, %v117
    %v133 = vpack.c.b16 %v120, %v119
    %v134 = vpack.c.b16 %v122, %v121
    %v135 = vpack.c.b16 %v124, %v123
    %v136 = vpack.c.b16 %v126, %v125
    %v137 = vpack.c.b16 %v128, %v127
    %v138 = vpack.c.b16 %v130, %v129
    %147 = vmatprep.subr.bf16.mxu0 0
    %148 = vmatpush1.bf16.msra.mxu0 %v131
    %149 = vmatprep.subr.bf16.mxu0 0
    %150 = vmatpush1.bf16.msra.mxu0 %v132
    %151 = vmatprep.subr.bf16.mxu0 0
    %152 = vmatpush1.bf16.msra.mxu0 %v133
    %153 = vmatprep.subr.bf16.mxu0 0
    %154 = vmatpush1.bf16.msra.mxu0 %v134
    %155 = vmatprep.subr.bf16.mxu0 0
    %156 = vmatpush1.bf16.msra.mxu0 %v135
    %157 = vmatprep.subr.bf16.mxu0 0
    %158 = vmatpush1.bf16.msra.mxu0 %v136
    %159 = vmatprep.subr.bf16.mxu0 0
    %160 = vmatpush1.bf16.msra.mxu0 %v137
    %161 = vmatprep.subr.bf16.mxu0 0
    %162 = vmatpush1.bf16.msra.mxu0 %v138
    %163 = vmatprep.subr.bf16.mxu0 0
    %164 = vmatpush1.bf16.msra.mxu0 0
    %165 = vmatprep.subr.bf16.mxu0 0
    %166 = vmatpush1.bf16.msra.mxu0 0
    %167 = vmatprep.subr.bf16.mxu0 0
    %168 = vmatpush1.bf16.msra.mxu0 0
    %169 = vmatprep.subr.bf16.mxu0 0
    %170 = vmatpush1.bf16.msra.mxu0 0
    %171 = vmatprep.subr.bf16.mxu0 0
    %172 = vmatpush1.bf16.msra.mxu0 0
    %173 = vmatprep.subr.bf16.mxu0 0
    %174 = vmatpush1.bf16.msra.mxu0 0
    %175 = vmatprep.subr.bf16.mxu0 0
    %176 = vmatpush1.bf16.msra.mxu0 0
    %177 = vmatprep.subr.bf16.mxu0 0
    %178 = vmatpush1.bf16.msra.mxu0 0
    %179 = vmatprep.mubr.bf16.mxu0 0
    %180 = vmatmul.mubr.bf16.gmra.mrb[0].mxu0 %v82
    %v181 = vpop.f32.mrb[0].mxu0
    %v182 = vadd.f32 0.0, %v181
    %v183 = vpop.f32.mrb[0].mxu0
    %v184 = vpop.f32.mrb[0].mxu0
    %v185 = vadd.f32 0.0, %v184
    %v186 = vpop.f32.mrb[0].mxu0
    %187 = vdwg.mxu0
    %v188 = vpack.c.bf16 %v185, %v182
    %v189 = vld [vmem:[#allocation5] sm:$0xf]
    %v190 = vld [vmem:[#allocation5 + $0x4] sm:$0xf]
    %v191 = vld [vmem:[#allocation5 + $0x8] sm:$0xf]
    %v192 = vld [vmem:[#allocation5 + $0xc] sm:$0xf]
    %v193 = vld [vmem:[#allocation5 + $0x10] sm:$0xf]
    %v194 = vld [vmem:[#allocation5 + $0x14] sm:$0xf]
    %v195 = vld [vmem:[#allocation5 + $0x18] sm:$0xf]
    %v196 = vld [vmem:[#allocation5 + $0x1c] sm:$0xf]
    %v197 = vld [vmem:[#allocation5 + $0x20] sm:$0xf]
    %v198 = vld [vmem:[#allocation5 + $0x24] sm:$0xf]
    %v199 = vld [vmem:[#allocation5 + $0x28] sm:$0xf]
    %v200 = vld [vmem:[#allocation5 + $0x2c] sm:$0xf]
    %v201 = vld [vmem:[#allocation5 + $0x30] sm:$0xf]
    %v202 = vld [vmem:[#allocation5 + $0x34] sm:$0xf]
    %v203 = vld [vmem:[#allocation5 + $0x38] sm:$0xf]
    %v204 = vld [vmem:[#allocation5 + $0x3c] sm:$0xf]
    %v205 = vld [vmem:[%s3] sm:$0x1]
    %v207 = vlaneseq
    %v208 = vshrl.u32 %v207, 7
    %v209 = vsub.s32 0, %v208
    %v210 = vrot.slane %v205, %v209
    %v228 = vunpack.c.l.b16 %v189
    %v229 = vunpack.c.l.b16 %v190
    %v230 = vunpack.c.l.b16 %v191
    %v231 = vunpack.c.l.b16 %v192
    %v232 = vunpack.c.l.b16 %v193
    %v233 = vunpack.c.l.b16 %v194
    %v234 = vunpack.c.l.b16 %v195
    %v235 = vunpack.c.l.b16 %v196
    %v236 = vunpack.c.l.b16 %v197
    %v237 = vunpack.c.l.b16 %v198
    %v238 = vunpack.c.l.b16 %v199
    %v239 = vunpack.c.l.b16 %v200
    %v240 = vunpack.c.l.b16 %v201
    %v241 = vunpack.c.l.b16 %v202
    %v242 = vunpack.c.l.b16 %v203
    %v243 = vunpack.c.l.b16 %v204
    %v244 = vpack.c.b16 %v229, %v228
    %v245 = vpack.c.b16 %v231, %v230
    %v246 = vpack.c.b16 %v233, %v232
    %v247 = vpack.c.b16 %v235, %v234
    %v248 = vpack.c.b16 %v237, %v236
    %v249 = vpack.c.b16 %v239, %v238
    %v250 = vpack.c.b16 %v241, %v240
    %v251 = vpack.c.b16 %v243, %v242
    %260 = vmatprep.subr.bf16.mxu0 0
    %261 = vmatpush1.bf16.msra.mxu0 %v244
    %262 = vmatprep.subr.bf16.mxu0 0
    %263 = vmatpush1.bf16.msra.mxu0 %v245
    %264 = vmatprep.subr.bf16.mxu0 0
    %265 = vmatpush1.bf16.msra.mxu0 %v246
    %266 = vmatprep.subr.bf16.mxu0 0
    %267 = vmatpush1.bf16.msra.mxu0 %v247
    %268 = vmatprep.subr.bf16.mxu0 0
    %269 = vmatpush1.bf16.msra.mxu0 %v248
    %270 = vmatprep.subr.bf16.mxu0 0
    %271 = vmatpush1.bf16.msra.mxu0 %v249
    %272 = vmatprep.subr.bf16.mxu0 0
    %273 = vmatpush1.bf16.msra.mxu0 %v250
    %274 = vmatprep.subr.bf16.mxu0 0
    %275 = vmatpush1.bf16.msra.mxu0 %v251
    %276 = vmatprep.subr.bf16.mxu0 0
    %277 = vmatpush1.bf16.msra.mxu0 0
    %278 = vmatprep.subr.bf16.mxu0 0
    %279 = vmatpush1.bf16.msra.mxu0 0
    %280 = vmatprep.subr.bf16.mxu0 0
    %281 = vmatpush1.bf16.msra.mxu0 0
    %282 = vmatprep.subr.bf16.mxu0 0
    %283 = vmatpush1.bf16.msra.mxu0 0
    %284 = vmatprep.subr.bf16.mxu0 0
    %285 = vmatpush1.bf16.msra.mxu0 0
    %286 = vmatprep.subr.bf16.mxu0 0
    %287 = vmatpush1.bf16.msra.mxu0 0
    %288 = vmatprep.subr.bf16.mxu0 0
    %289 = vmatpush1.bf16.msra.mxu0 0
    %290 = vmatprep.subr.bf16.mxu0 0
    %291 = vmatpush1.bf16.msra.mxu0 0
    %292 = vmatprep.mubr.bf16.mxu0 0
    %293 = vmatmul.mubr.bf16.gmra.mrb[0].mxu0 %v188
    %v294 = vpop.f32.mrb[0].mxu0
    %v295 = vadd.f32 %v210, %v294
    %v296 = vpop.f32.mrb[0].mxu0
    %v297 = vpop.f32.mrb[0].mxu0
    %v298 = vadd.f32 %v210, %v297
    %v299 = vpop.f32.mrb[0].mxu0
    %300 = vdwg.mxu0
    %v301 = vxor.u32 %v295, 2147483648
    %v302 = vxor.u32 %v298, 2147483648
    %v303 = vmul.f32 %v301, 1.442695
    %v304 = vpow.pop %v303
    %v305 = vmul.f32 %v302, 1.442695
    %v306 = vpow.pop %v305
    %v307 = vadd.f32 %v304, 1.0
    %v308 = vadd.f32 %v306, 1.0
    %v309 = vrcp.pop %v307
    %v310 = vmul.f32 1.0, %v309
    %v311 = vrcp.pop %v308
    %v312 = vmul.f32 1.0, %v311
    %v313 = vmul.f32 %v295, %v310
    %v314 = vmul.f32 %v298, %v312
    %v315 = vpack.c.bf16 %v314, %v313
    %v316 = vld [vmem:[#allocation7] sm:$0xf]
    %v317 = vld [vmem:[#allocation7 + $0x4] sm:$0xf]
    %v318 = vld [vmem:[#allocation7 + $0x8] sm:$0xf]
    %v319 = vld [vmem:[#allocation7 + $0xc] sm:$0xf]
    %v320 = vld [vmem:[#allocation7 + $0x10] sm:$0xf]
    %v321 = vld [vmem:[#allocation7 + $0x14] sm:$0xf]
    %v322 = vld [vmem:[#allocation7 + $0x18] sm:$0xf]
    %v323 = vld [vmem:[#allocation7 + $0x1c] sm:$0xf]
    %v324 = vld [vmem:[#allocation7 + $0x20] sm:$0xf]
    %v325 = vld [vmem:[#allocation7 + $0x24] sm:$0xf]
    %v326 = vld [vmem:[#allocation7 + $0x28] sm:$0xf]
    %v327 = vld [vmem:[#allocation7 + $0x2c] sm:$0xf]
    %v328 = vld [vmem:[#allocation7 + $0x30] sm:$0xf]
    %v329 = vld [vmem:[#allocation7 + $0x34] sm:$0xf]
    %v330 = vld [vmem:[#allocation7 + $0x38] sm:$0xf]
    %v331 = vld [vmem:[#allocation7 + $0x3c] sm:$0xf]
    %v332 = vld [vmem:[%s5] sm:$0x1]
    %v334 = vlaneseq
    %v335 = vshrl.u32 %v334, 7
    %v336 = vsub.s32 0, %v335
    %v337 = vrot.slane %v332, %v336
    %v355 = vunpack.c.l.b16 %v316
    %v356 = vunpack.c.l.b16 %v317
    %v357 = vunpack.c.l.b16 %v318
    %v358 = vunpack.c.l.b16 %v319
    %v359 = vunpack.c.l.b16 %v320
    %v360 = vunpack.c.l.b16 %v321
    %v361 = vunpack.c.l.b16 %v322
    %v362 = vunpack.c.l.b16 %v323
    %v363 = vunpack.c.l.b16 %v324
    %v364 = vunpack.c.l.b16 %v325
    %v365 = vunpack.c.l.b16 %v326
    %v366 = vunpack.c.l.b16 %v327
    %v367 = vunpack.c.l.b16 %v328
    %v368 = vunpack.c.l.b16 %v329
    %v369 = vunpack.c.l.b16 %v330
    %v370 = vunpack.c.l.b16 %v331
    %v371 = vpack.c.b16 %v356, %v355
    %v372 = vpack.c.b16 %v358, %v357
    %v373 = vpack.c.b16 %v360, %v359
    %v374 = vpack.c.b16 %v362, %v361
    %v375 = vpack.c.b16 %v364, %v363
    %v376 = vpack.c.b16 %v366, %v365
    %v377 = vpack.c.b16 %v368, %v367
    %v378 = vpack.c.b16 %v370, %v369
    %387 = vmatprep.subr.bf16.mxu0 0
    %388 = vmatpush1.bf16.msra.mxu0 %v371
    %389 = vmatprep.subr.bf16.mxu0 0
    %390 = vmatpush1.bf16.msra.mxu0 %v372
    %391 = vmatprep.subr.bf16.mxu0 0
    %392 = vmatpush1.bf16.msra.mxu0 %v373
    %393 = vmatprep.subr.bf16.mxu0 0
    %394 = vmatpush1.bf16.msra.mxu0 %v374
    %395 = vmatprep.subr.bf16.mxu0 0
    %396 = vmatpush1.bf16.msra.mxu0 %v375
    %397 = vmatprep.subr.bf16.mxu0 0
    %398 = vmatpush1.bf16.msra.mxu0 %v376
    %399 = vmatprep.subr.bf16.mxu0 0
    %400 = vmatpush1.bf16.msra.mxu0 %v377
    %401 = vmatprep.subr.bf16.mxu0 0
    %402 = vmatpush1.bf16.msra.mxu0 %v378
    %403 = vmatprep.subr.bf16.mxu0 0
    %404 = vmatpush1.bf16.msra.mxu0 0
    %405 = vmatprep.subr.bf16.mxu0 0
    %406 = vmatpush1.bf16.msra.mxu0 0
    %407 = vmatprep.subr.bf16.mxu0 0
    %408 = vmatpush1.bf16.msra.mxu0 0
    %409 = vmatprep.subr.bf16.mxu0 0
    %410 = vmatpush1.bf16.msra.mxu0 0
    %411 = vmatprep.subr.bf16.mxu0 0
    %412 = vmatpush1.bf16.msra.mxu0 0
    %413 = vmatprep.subr.bf16.mxu0 0
    %414 = vmatpush1.bf16.msra.mxu0 0
    %415 = vmatprep.subr.bf16.mxu0 0
    %416 = vmatpush1.bf16.msra.mxu0 0
    %417 = vmatprep.subr.bf16.mxu0 0
    %418 = vmatpush1.bf16.msra.mxu0 0
    %419 = vmatprep.mubr.bf16.mxu0 0
    %420 = vmatmul.mubr.bf16.gmra.mrb[0].mxu0 %v315
    %v421 = vpop.f32.mrb[0].mxu0
    %v422 = vadd.f32 %v337, %v421
    %v423 = vpop.f32.mrb[0].mxu0
    %v424 = vpop.f32.mrb[0].mxu0
    %v425 = vadd.f32 %v337, %v424
    %v426 = vpop.f32.mrb[0].mxu0
    %427 = vdwg.mxu0
    %428 = vst [vmem:[#allocation8] sm:$0xff] %v422
    %429 = vst [vmem:[#allocation8 + $0x8] sm:$0xff] %v425
    // Predicated region
    $region38: #{tpu_custom_call.1} parent=1 // pred_check
      _
    $region39: #{tpu_custom_call.1} parent=1 // pred_check_branch
      %431 = sbr.rel (0) target = $region41
    $region40: #{tpu_custom_call.1} parent=1 // pred_region
      %s433 = ssub.s32 256, 256
      %434 = vsyncadd [#allocation4], %s433
      %s435 = sshll.u32 [#allocation8], 4
      %s436 = int_to_ptr.vmem [resolvable:$true] %s435
      %441 = dma.vmem_to_hbm [thread:$0]  %s436, 256, %s6, [#allocation4], 128, 128, 8
    $region41: #{tpu_custom_call.1} parent=1 // pred_fallthru
      _
    // Predicated region
    $region42: #{tpu_custom_call.1} parent=1 // pred_check
      _
    $region43: #{tpu_custom_call.1} parent=1 // pred_check_branch
      %443 = sbr.rel (0) target = $region45
    $region44: #{tpu_custom_call.1} parent=1 // pred_region
      %444 = dma.done [#allocation4], 256
    $region45: #{tpu_custom_call.1} parent=1 // pred_fallthru
      _
    %445 = vsyncpa [#allocation3], 1
    %446 = vsyncpa [#allocation6], 1
    %447 = vsyncpa [#allocation4], 1

</llo_original>
